<compile_context>
chip_gen: v5e
topology: v5e:2x2
jax: 0.10.0
libtpu: 0.0.40
codegen_flags: <defaults>
</compile_context>

<pallas_src>
import functools

import jax
import jax.numpy as jnp
import numpy as np
from jax.experimental import pallas as pl
from jax.experimental.pallas import tpu as pltpu


def _cdiv(a, b):
    return -(-a // b)


def _dice_sums_kernel(logits_ref, target_ref, inter_ref, union_ref, *,
                      length, tile_l, tiles_per_split, exp_in_bf16):
    split = pl.program_id(0)
    l = pl.program_id(1)

    @pl.when(l == 0)
    def _():
        inter_ref[...] = jnp.zeros_like(inter_ref)
        union_ref[...] = jnp.zeros_like(union_ref)

    tl = logits_ref.shape[-1]

    # Lane validity for this tile: handles the ragged last tile and the
    # phantom trailing tile a split gets when the tile count is odd.
    start = (split * tiles_per_split + l) * tile_l
    lane = jax.lax.broadcasted_iota(jnp.int32, (1, 1, tl), 2)
    valid = (start + lane) < length                       # (1, 1, tl) bool

    # softmax over the channel axis (== F.softmax(logits, dim=1)).
    x = logits_ref[...].astype(jnp.float32)
    x = jnp.where(valid, x, 0.0)          # kill edge-tile garbage before exp
    m = jnp.max(x, axis=1, keepdims=True)
    z = x - m
    if exp_in_bf16:
        e = jnp.exp(z.astype(jnp.bfloat16)).astype(jnp.float32)
    else:
        e = jnp.exp(z)
    denom = jnp.sum(e, axis=1, keepdims=True)
    pred = e * pl.reciprocal(denom, approx=True)          # (N, C, tl)

    # Fused one-hot / mask: hit == (target == class) on valid lanes only.
    cls = jax.lax.broadcasted_iota(jnp.int32, pred.shape, 1)
    hit = jnp.logical_and(target_ref[...] == cls, valid)  # (N, C, tl)

    inter_t = jnp.where(hit, pred, 0.0)
    union_t = jnp.where(valid, pred, 0.0) + jnp.where(hit, 1.0, 0.0)

    inter_ref[...] += jnp.sum(inter_t, axis=2)[None]       # (1, N, C)
    union_ref[...] += jnp.sum(union_t, axis=2)[None]


def _pick_tile_l(L, bytes_per_lane, tile_l):
    """Largest lane tile (multiple of 128) that fits L and a ~12 MiB
    double-buffered input budget (safe on every TPU generation's default
    scoped-VMEM limit, incl. v5e's 16 MiB and v7x's 64 MiB physical)."""
    if L <= 128:
        return L                                   # full-dim block is allowed
    budget = 12 * 1024 * 1024
    max_by_vmem = max(128, (budget // (2 * bytes_per_lane) // 128) * 128)
    max_by_l = (L // 128) * 128
    t = min(max(128, (tile_l // 128) * 128), max_by_l, max_by_vmem)
    return max(128, t)


def _default_exp_in_bf16():
    # bf16 EUP exists on v6e/v7x but not v5e (or older) -> gate the bf16 exp.
    try:
        kind = jax.devices()[0].device_kind.lower()
    except Exception:
        return False
    return ("v6" in kind) or ("v7" in kind) or ("7x" in kind)


def dice_loss(logits, target, class_weights=None, mask=None, smooth=1e-5,
              tile_l=8192, exp_in_bf16=None):
    """Pallas implementation of DiceLoss.forward (mask=None path).

    logits: (N, C, *spatial) float; target: (N, 1, *spatial) integer labels.
    `class_weights` mirrors the PyTorch module's parameter but (like the
    reference forward) is unused.
    """
    del class_weights  # the reference forward never uses it
    # TODO(synk): mask=None path only; a user mask would be folded into the
    # in-kernel `valid` predicate as one extra (N, 1, tile_l) input stream.
    assert mask is None

    N, C = int(logits.shape[0]), int(logits.shape[1])
    L = int(np.prod(logits.shape[2:]))
    logits = logits.reshape(N, C, L)                 # keep caller dtype (bf16 ok)
    target = target.reshape(N, 1, L).astype(jnp.int32)

    if C == 1:
        # sigmoid branch: cat([1 - sigmoid(x), sigmoid(x)]) == softmax([0, x])
        logits = jnp.concatenate([jnp.zeros_like(logits), logits], axis=1)
        C = 2

    if exp_in_bf16 is None:
        exp_in_bf16 = _default_exp_in_bf16()

    bytes_per_lane = N * C * logits.dtype.itemsize + N * 4
    tl = _pick_tile_l(L, bytes_per_lane, tile_l)
    num_tiles = _cdiv(L, tl)
    n_split = 2 if num_tiles >= 2 else 1       # use both v7x TensorCores
    tiles_per_split = _cdiv(num_tiles, n_split)

    kernel = functools.partial(
        _dice_sums_kernel, length=L, tile_l=tl,
        tiles_per_split=tiles_per_split, exp_in_bf16=bool(exp_in_bf16))

    def in_map(s, l):
        # Clamp the (possible) phantom trailing tile back in bounds; all of
        # its lanes fail the in-kernel validity test so it contributes 0.
        return (0, 0, jnp.minimum(s * tiles_per_split + l, num_tiles - 1))

    inter, union = pl.pallas_call(
        kernel,
        out_shape=(
            jax.ShapeDtypeStruct((n_split, N, C), jnp.float32),
            jax.ShapeDtypeStruct((n_split, N, C), jnp.float32),
        ),
        grid_spec=pltpu.PrefetchScalarGridSpec(
            num_scalar_prefetch=0,
            grid=(n_split, tiles_per_split),
            in_specs=[
                pl.BlockSpec((N, C, tl), in_map),
                pl.BlockSpec((N, 1, tl), in_map),
            ],
            out_specs=[
                pl.BlockSpec((1, N, C), lambda s, l: (s, 0, 0)),
                pl.BlockSpec((1, N, C), lambda s, l: (s, 0, 0)),
            ],
        ),
        compiler_params=pltpu.CompilerParams(
            dimension_semantics=("parallel", "arbitrary")),
    )(logits, target)

    inter = jnp.sum(inter, axis=0)
    union = jnp.sum(union, axis=0)
    dice = (2.0 * inter + smooth) / (union + smooth)
    return 1.0 - jnp.mean(dice)


def _reference_dice_loss(logits, target, smooth=1e-5):
    """Pure-JAX reference mirroring the PyTorch forward (softmax branch)."""
    N, C = logits.shape[0], logits.shape[1]
    lg = logits.reshape(N, C, -1).astype(jnp.float32)
    tg = target.reshape(N, 1, -1).astype(jnp.int32)
    pred = jax.nn.softmax(lg, axis=1)
    one_hot = (tg == jax.lax.broadcasted_iota(jnp.int32, pred.shape, 1)
               ).astype(jnp.float32)
    inter = jnp.sum(pred * one_hot, axis=2)
    union = jnp.sum(pred + one_hot, axis=2)
    dice = (2.0 * inter + smooth) / (union + smooth)
    return 1.0 - jnp.mean(dice)


if __name__ == "__main__":
    nclass = 4
    N, H, W = 2, 16, 16

    # Deterministic "parameter" matching nn.Parameter(torch.ones((1, nclass)));
    # the reference forward never uses it.
    class_weights = jnp.ones((1, nclass), jnp.float32)

    key = jax.random.PRNGKey(0)
    k_logits, k_target = jax.random.split(key)
    logits = jax.random.normal(k_logits, (N, nclass, H, W), dtype=jnp.float32)
    target = jax.random.randint(k_target, (N, 1, H, W), 0, nclass,
                                dtype=jnp.int32)

    ref = jax.block_until_ready(_reference_dice_loss(logits, target))

    # 1) f32-exp path: tight-ish check (only the approx reciprocal perturbs).
    loss_f32 = jax.block_until_ready(
        dice_loss(logits, target, class_weights=class_weights,
                  exp_in_bf16=False))
    assert np.allclose(np.asarray(loss_f32), np.asarray(ref),
                       rtol=5e-3, atol=5e-3), (
        f"pallas(f32 exp)={float(loss_f32)} ref={float(ref)}")

    # 2) default/auto config (bf16 exp on v6e/v7x): loosened tolerance.
    loss = jax.block_until_ready(
        dice_loss(logits, target, class_weights=class_weights))
    assert np.allclose(np.asarray(loss), np.asarray(ref),
                       rtol=2e-2, atol=2e-2), (
        f"pallas(default)={float(loss)} ref={float(ref)}")

    # 3) ragged spatial size (L not a multiple of 128) exercises the in-kernel
    #    validity mask and the 2-way split with a partial edge block.
    k2_l, k2_t = jax.random.split(jax.random.PRNGKey(0), 2)
    logits2 = jax.random.normal(k2_l, (N, nclass, 11, 13), dtype=jnp.float32)
    target2 = jax.random.randint(k2_t, (N, 1, 11, 13), 0, nclass,
                                 dtype=jnp.int32)
    ref2 = jax.block_until_ready(_reference_dice_loss(logits2, target2))
    loss2 = jax.block_until_ready(
        dice_loss(logits2, target2, exp_in_bf16=False))
    assert np.allclose(np.asarray(loss2), np.asarray(ref2),
                       rtol=5e-3, atol=5e-3), (
        f"pallas(ragged)={float(loss2)} ref={float(ref2)}")

    print("KERNEL_OK")
</pallas_src>

<mosaic_0001>
module attributes {stable_mosaic.version = 11 : i64} {
  func.func @_dice_sums_kernel(%arg0: i32, %arg1: i32, %arg2: memref<2x4x256xf32, #tpu.memory_space<vmem>>, %arg3: memref<2x1x256xi32, #tpu.memory_space<vmem>>, %arg4: memref<1x2x4xf32, #tpu.memory_space<vmem>>, %arg5: memref<1x2x4xf32, #tpu.memory_space<vmem>>) attributes {dimension_semantics = [#tpu.dimension_semantics<parallel>, #tpu.dimension_semantics<arbitrary>], iteration_bounds = array<i64: 1, 1>, scalar_prefetch = 0 : i64, scratch_operands = 0 : i64, tpu.core_type = #tpu.core_type<tc>, window_params = [{transform_indices = @transform_0, window_bounds = array<i64: 2, 4, 256>}, {transform_indices = @transform_1, window_bounds = array<i64: 2, 1, 256>}, {transform_indices = @transform_2, window_bounds = array<i64: 1, 2, 4>}, {transform_indices = @transform_3, window_bounds = array<i64: 1, 2, 4>}]} {
    %c0_i32 = arith.constant 0 : i32
    %0 = arith.cmpi eq, %arg1, %c0_i32 : i32
    %1 = arith.extui %0 : i1 to i32
    %c0_i32_0 = arith.constant 0 : i32
    %2 = arith.cmpi ne, %1, %c0_i32_0 : i32
    scf.if %2 {
      %cst_27 = arith.constant 0.000000e+00 : f32
      %52 = vector.broadcast %cst_27 : f32 to vector<1x2x4xf32>
      %c0_28 = arith.constant 0 : index
      %c0_29 = arith.constant 0 : index
      %c0_30 = arith.constant 0 : index
      %53 = vector.load %arg4[%c0_28, %c0_29, %c0_30] : memref<1x2x4xf32, #tpu.memory_space<vmem>>, vector<1x2x4xf32>
      tpu.vector_store %arg4[%c0_28, %c0_29, %c0_30], %52 {strides = array<i32>} : memref<1x2x4xf32, #tpu.memory_space<vmem>>, vector<1x2x4xf32>,
      %cst_31 = arith.constant 0.000000e+00 : f32
      %54 = vector.broadcast %cst_31 : f32 to vector<1x2x4xf32>
      %c0_32 = arith.constant 0 : index
      %c0_33 = arith.constant 0 : index
      %c0_34 = arith.constant 0 : index
      %55 = vector.load %arg5[%c0_32, %c0_33, %c0_34] : memref<1x2x4xf32, #tpu.memory_space<vmem>>, vector<1x2x4xf32>
      tpu.vector_store %arg5[%c0_32, %c0_33, %c0_34], %54 {strides = array<i32>} : memref<1x2x4xf32, #tpu.memory_space<vmem>>, vector<1x2x4xf32>,
    } else {
    }
    %c1_i32 = arith.constant 1 : i32
    %3 = arith.muli %arg0, %c1_i32 : i32
    %4 = arith.addi %3, %arg1 : i32
    %c256_i32 = arith.constant 256 : i32
    %5 = arith.muli %4, %c256_i32 : i32
    %6 = tpu.iota {dimensions = array<i32: 2>} : vector<1x1x256xi32>
    %7 = vector.broadcast %5 : i32 to vector<1x1x256xi32>
    %8 = arith.addi %7, %6 : vector<1x1x256xi32>
    %c256_i32_1 = arith.constant 256 : i32
    %9 = vector.broadcast %c256_i32_1 : i32 to vector<1x1x256xi32>
    %10 = arith.cmpi slt, %8, %9 : vector<1x1x256xi32>
    %c0 = arith.constant 0 : index
    %c0_2 = arith.constant 0 : index
    %c0_3 = arith.constant 0 : index
    %11 = vector.load %arg2[%c0, %c0_2, %c0_3] : memref<2x4x256xf32, #tpu.memory_space<vmem>>, vector<2x4x256xf32>
    %cst = arith.constant 0.000000e+00 : f32
    %12 = vector.shape_cast %10 : vector<1x1x256xi1> to vector<1x1x256xi1>
    %13 = vector.broadcast %12 : vector<1x1x256xi1> to vector<2x4x256xi1>
    %14 = vector.broadcast %cst : f32 to vector<2x4x256xf32>
    %15 = arith.select %13, %11, %14 : vector<2x4x256xi1>, vector<2x4x256xf32>
    %cst_4 = arith.constant dense<0xFF800000> : vector<2x256xf32>
    %16 = vector.multi_reduction <maximumf>, %15, %cst_4 [1] : vector<2x4x256xf32> to vector<2x256xf32>
    %17 = vector.shape_cast %16 : vector<2x256xf32> to vector<2x1x256xf32>
    %18 = vector.broadcast %17 : vector<2x1x256xf32> to vector<2x4x256xf32>
    %19 = arith.subf %15, %18 : vector<2x4x256xf32>
    %20 = math.exp %19 : vector<2x4x256xf32>
    %cst_5 = arith.constant dense<0.000000e+00> : vector<2x256xf32>
    %21 = vector.multi_reduction <add>, %20, %cst_5 [1] : vector<2x4x256xf32> to vector<2x256xf32>
    %22 = vector.shape_cast %21 : vector<2x256xf32> to vector<2x1x256xf32>
    %23 = tpu.reciprocal %22 {approx = true} : vector<2x1x256xf32> -> vector<2x1x256xf32>
    %24 = vector.broadcast %23 : vector<2x1x256xf32> to vector<2x4x256xf32>
    %25 = arith.mulf %20, %24 : vector<2x4x256xf32>
    %26 = tpu.iota {dimensions = array<i32: 1>} : vector<2x4x256xi32>
    %c0_6 = arith.constant 0 : index
    %c0_7 = arith.constant 0 : index
    %c0_8 = arith.constant 0 : index
    %27 = vector.load %arg3[%c0_6, %c0_7, %c0_8] : memref<2x1x256xi32, #tpu.memory_space<vmem>>, vector<2x1x256xi32>
    %28 = vector.broadcast %27 : vector<2x1x256xi32> to vector<2x4x256xi32>
    %29 = arith.cmpi eq, %28, %26 : vector<2x4x256xi32>
    %30 = vector.broadcast %10 : vector<1x1x256xi1> to vector<2x4x256xi1>
    %31 = arith.andi %29, %30 : vector<2x4x256xi1>
    %cst_9 = arith.constant 0.000000e+00 : f32
    %32 = vector.broadcast %cst_9 : f32 to vector<2x4x256xf32>
    %33 = arith.select %31, %25, %32 : vector<2x4x256xi1>, vector<2x4x256xf32>
    %cst_10 = arith.constant 0.000000e+00 : f32
    %34 = vector.shape_cast %10 : vector<1x1x256xi1> to vector<1x1x256xi1>
    %35 = vector.broadcast %34 : vector<1x1x256xi1> to vector<2x4x256xi1>
    %36 = vector.broadcast %cst_10 : f32 to vector<2x4x256xf32>
    %37 = arith.select %35, %25, %36 : vector<2x4x256xi1>, vector<2x4x256xf32>
    %cst_11 = arith.constant 1.000000e+00 : f32
    %cst_12 = arith.constant 0.000000e+00 : f32
    %38 = vector.broadcast %cst_11 : f32 to vector<2x4x256xf32>
    %39 = vector.broadcast %cst_12 : f32 to vector<2x4x256xf32>
    %40 = arith.select %31, %38, %39 : vector<2x4x256xi1>, vector<2x4x256xf32>
    %41 = arith.addf %37, %40 : vector<2x4x256xf32>
    %c0_13 = arith.constant 0 : index
    %c0_14 = arith.constant 0 : index
    %c0_15 = arith.constant 0 : index
    %42 = vector.load %arg4[%c0_13, %c0_14, %c0_15] : memref<1x2x4xf32, #tpu.memory_space<vmem>>, vector<1x2x4xf32>
    %cst_16 = arith.constant dense<0.000000e+00> : vector<2x4xf32>
    %43 = vector.multi_reduction <add>, %33, %cst_16 [2] : vector<2x4x256xf32> to vector<2x4xf32>
    %44 = vector.shape_cast %43 : vector<2x4xf32> to vector<1x2x4xf32>
    %45 = arith.addf %42, %44 : vector<1x2x4xf32>
    %c0_17 = arith.constant 0 : index
    %c0_18 = arith.constant 0 : index
    %c0_19 = arith.constant 0 : index
    %46 = vector.load %arg4[%c0_17, %c0_18, %c0_19] : memref<1x2x4xf32, #tpu.memory_space<vmem>>, vector<1x2x4xf32>
    tpu.vector_store %arg4[%c0_17, %c0_18, %c0_19], %45 {strides = array<i32>} : memref<1x2x4xf32, #tpu.memory_space<vmem>>, vector<1x2x4xf32>,
    %c0_20 = arith.constant 0 : index
    %c0_21 = arith.constant 0 : index
    %c0_22 = arith.constant 0 : index
    %47 = vector.load %arg5[%c0_20, %c0_21, %c0_22] : memref<1x2x4xf32, #tpu.memory_space<vmem>>, vector<1x2x4xf32>
    %cst_23 = arith.constant dense<0.000000e+00> : vector<2x4xf32>
    %48 = vector.multi_reduction <add>, %41, %cst_23 [2] : vector<2x4x256xf32> to vector<2x4xf32>
    %49 = vector.shape_cast %48 : vector<2x4xf32> to vector<1x2x4xf32>
    %50 = arith.addf %47, %49 : vector<1x2x4xf32>
    %c0_24 = arith.constant 0 : index
    %c0_25 = arith.constant 0 : index
    %c0_26 = arith.constant 0 : index
    %51 = vector.load %arg5[%c0_24, %c0_25, %c0_26] : memref<1x2x4xf32, #tpu.memory_space<vmem>>, vector<1x2x4xf32>
    tpu.vector_store %arg5[%c0_24, %c0_25, %c0_26], %50 {strides = array<i32>} : memref<1x2x4xf32, #tpu.memory_space<vmem>>, vector<1x2x4xf32>,
    return
  }
  func.func @transform_0(%arg0: i32, %arg1: i32) -> (i32, i32, i32) {
    %c1_i32 = arith.constant 1 : i32
    %0 = arith.muli %arg0, %c1_i32 : i32
    %1 = arith.addi %0, %arg1 : i32
    %c0_i32 = arith.constant 0 : i32
    %2 = arith.minsi %1, %c0_i32 : i32
    %c0_i32_0 = arith.constant 0 : i32
    %c0_i32_1 = arith.constant 0 : i32
    %c0_i32_2 = arith.constant 0 : i32
    return %c0_i32_0, %c0_i32_1, %2 : i32, i32, i32
  }
  func.func @transform_1(%arg0: i32, %arg1: i32) -> (i32, i32, i32) {
    %c1_i32 = arith.constant 1 : i32
    %0 = arith.muli %arg0, %c1_i32 : i32
    %1 = arith.addi %0, %arg1 : i32
    %c0_i32 = arith.constant 0 : i32
    %2 = arith.minsi %1, %c0_i32 : i32
    %c0_i32_0 = arith.constant 0 : i32
    %c0_i32_1 = arith.constant 0 : i32
    %c0_i32_2 = arith.constant 0 : i32
    return %c0_i32_0, %c0_i32_1, %2 : i32, i32, i32
  }
  func.func @transform_2(%arg0: i32, %arg1: i32) -> (i32, i32, i32) {
    %c0_i32 = arith.constant 0 : i32
    %c0_i32_0 = arith.constant 0 : i32
    %c0_i32_1 = arith.constant 0 : i32
    return %arg0, %c0_i32, %c0_i32_0 : i32, i32, i32
  }
  func.func @transform_3(%arg0: i32, %arg1: i32) -> (i32, i32, i32) {
    %c0_i32 = arith.constant 0 : i32
    %c0_i32_0 = arith.constant 0 : i32
    %c0_i32_1 = arith.constant 0 : i32
    return %arg0, %c0_i32, %c0_i32_0 : i32, i32, i32
  }
}

</mosaic_0001>

<llo_original>
// kernel: tpu_custom_call.1
$region0: #{tpu_custom_call.1}
  #allocation0 [shape = 'u32[]', space=smem, size = 0x4, offset = 0x4, fixed_abs, tag = 'smem constant byte address 0x4 - core index']
  #allocation1 [shape = 'u32[72,128]{1,0:T(1,128)}', space=vmem, size = 0x9000, scoped, tag = 'internal scratch']
  %s0 = inlined_call_operand.hbm [shape: f32[2,4,256], index: 0, kind: input, shape index: {}]
  %s1 = inlined_call_operand.hbm [shape: s32[2,1,256], index: 1, kind: input, shape index: {}]
  %s2 = inlined_call_operand.hbm [shape: f32[1,2,4], index: 2, kind: output, shape index: {0}]
  %s3 = inlined_call_operand.hbm [shape: f32[1,2,4], index: 3, kind: output, shape index: {1}]
  %4 = xla_tuple %s2, %s3
  %s5 = sld [smem:[#allocation0]]
  $region38: #{tpu_custom_call.1} parent=0
    _
  %s7 = ssub.s32 1, %s5
  %s8 = scalar_select 0, %s7, %s5
  $region1: #{tpu_custom_call.1} parent=0
    #allocation2 [shape = 'u8[8192]{0}', space=vmem, size = 0x2000, scoped, tag = 'input window, operand 0, single buffered']
    #allocation3 [shape = 's32[1]{0}', space=sflag, size = 0x4, scoped, tag = 'scoped memory for tpu_custom_call.1']
    #allocation4 [shape = 's32[1]{0}', space=sflag, size = 0x4, scoped, tag = 'scoped memory for tpu_custom_call.1']
    #allocation5 [shape = 'u8[2048]{0}', space=vmem, size = 0x800, scoped, tag = 'input window, operand 1, single buffered']
    #allocation6 [shape = 's32[1]{0}', space=sflag, size = 0x4, scoped, tag = 'scoped memory for tpu_custom_call.1']
    #allocation7 [shape = 'u8[1024]{0}', space=vmem, size = 0x400, scoped, tag = 'output window, operand 0, single buffered']
    #allocation8 [shape = 'u8[1024]{0}', space=vmem, size = 0x400, scoped, tag = 'output window, operand 1, single buffered']
    #allocation9 [shape = 's32[1]{0}', space=sflag, size = 0x4, scoped, tag = 'scoped memory for tpu_custom_call.1']
    %9 = vsyncpa [#allocation3], 0
    %10 = vsyncpa [#allocation6], 0
    %11 = vsyncpa [#allocation4], 0
    %12 = vsyncpa [#allocation9], 0
    // Predicated region
    $region2: #{tpu_custom_call.1} parent=1 // pred_check
      _
    $region3: #{tpu_custom_call.1} parent=1 // pred_check_branch
      %14 = sbr.rel (0) target = $region5
    $region4: #{tpu_custom_call.1} parent=1 // pred_region
      %s15 = sadd.s32 0, 0
      %p16 = scmp.lt.s32.totalorder %s15, 0
      %s17 = scalar_select %p16, %s15, 0
      %s18 = smul.u32 2, %s17
      %20 = vsyncadd [#allocation3], 0
      %s21 = smul.addr %s18, 4
      %s22 = scalar_lea.hbm %s0, %s21
      %s23 = sshll.u32 %s22, 4
      %s24 = int_to_ptr.hbm [resolvable:$true] %s23
      %s25 = sshll.u32 [#allocation2], 4
      %s26 = int_to_ptr.vmem [resolvable:$true] %s25
      %31 = dma.hbm_to_vmem [thread:$0]  %s24, 256, %s26, [#allocation3], 128, 128, 8
    $region5: #{tpu_custom_call.1} parent=1 // pred_fallthru
      _
    // Predicated region
    $region6: #{tpu_custom_call.1} parent=1 // pred_check
      _
    $region7: #{tpu_custom_call.1} parent=1 // pred_check_branch
      %33 = sbr.rel (0) target = $region9
    $region8: #{tpu_custom_call.1} parent=1 // pred_region
      %s34 = sadd.s32 0, 0
      %p35 = scmp.lt.s32.totalorder %s34, 0
      %s36 = scalar_select %p35, %s34, 0
      %s37 = smul.u32 2, %s36
      %39 = vsyncadd [#allocation6], 0
      %s40 = scalar_lea.hbm %s1, %s37
      %s41 = sshll.u32 %s40, 4
      %s42 = int_to_ptr.hbm [resolvable:$true] %s41
      %s43 = sshll.u32 [#allocation5], 4
      %s44 = int_to_ptr.vmem [resolvable:$true] %s43
      %49 = dma.hbm_to_vmem [thread:$0]  %s42, 64, %s44, [#allocation6], 32, 32, 2
    $region9: #{tpu_custom_call.1} parent=1 // pred_fallthru
      _
    // Predicated region
    $region10: #{tpu_custom_call.1} parent=1 // pred_check
      _
    $region11: #{tpu_custom_call.1} parent=1 // pred_check_branch
      %51 = sbr.rel (0) target = $region13
    $region12: #{tpu_custom_call.1} parent=1 // pred_region
      %53 = dma.done [#allocation3], 256
    $region13: #{tpu_custom_call.1} parent=1 // pred_fallthru
      _
    // Predicated region
    $region14: #{tpu_custom_call.1} parent=1 // pred_check
      _
    $region15: #{tpu_custom_call.1} parent=1 // pred_check_branch
      %55 = sbr.rel (0) target = $region17
    $region16: #{tpu_custom_call.1} parent=1 // pred_region
      %57 = dma.done [#allocation6], 64
    $region17: #{tpu_custom_call.1} parent=1 // pred_fallthru
      _
    %s58 = sadd.s32 0, 0
    %p59 = scmp.lt.s32.totalorder %s58, 0
    %s60 = scalar_select %p59, %s58, 0
    %s61 = smul.u32 2, %s60
    %s62 = sadd.s32 0, 0
    %p63 = scmp.lt.s32.totalorder %s62, 0
    %s64 = scalar_select %p63, %s62, 0
    %s65 = smul.u32 2, %s64
    %p66 = scmp.eq.s32.totalorder 0, 0
    // Predicated region
    $region18: #{tpu_custom_call.1} parent=1 // pred_check
      %p67 = pneg %p66
    $region19: #{tpu_custom_call.1} parent=1 // pred_check_branch
      %69 = sbr.rel (%p67) target = $region21
    $region20: #{tpu_custom_call.1} parent=1 // pred_region
      %vm70 = vcmask 25600
      %71 = vst.msk [vmem:[#allocation7] sm:$0x3] %vm70, 0.0
      %72 = vst.msk [vmem:[#allocation8] sm:$0x3] %vm70, 0.0
    $region21: #{tpu_custom_call.1} parent=1 // pred_fallthru
      _
    %s73 = sadd.s32 0, 0
    %s74 = smul.u32 %s73, 256
    %v75 = vlaneseq
    %v76 = vand.u32 %v75, 127
    %v77 = vadd.s32 %v76, 128
    %v78 = vstv %s74
    %v79 = vadd.s32 %v78, %v76
    %v80 = vadd.s32 %v78, %v77
    %vm81 = vcmp.lt.s32.totalorder %v79, 256
    %vm82 = vcmp.lt.s32.totalorder %v80, 256
    %v83 = vld [vmem:[#allocation2] sm:$0xff]
    %v84 = vld [vmem:[#allocation2 + $0x8] sm:$0xff]
    %v85 = vsel %vm81, 1, 0
    %v86 = vsel %vm82, 1, 0
    %vm87 = vcmp.eq.s32.totalorder %v85, 1
    %vm88 = vcmp.eq.s32.totalorder %v86, 1
    %91 = vst [vmem:[#allocation1] ss:$2 sm:$0xff] %v83
    %v92 = vld.sshfl [vmem:[#allocation1] sm:$0xff pattern:$0x75316420]
    %v93 = vld.sshfl [vmem:[#allocation1 + $0x8] sm:$0xff pattern:$0x75316420]
    %s94 = scalar_lea.vmem [#allocation1], 16
    %95 = vst [vmem:[%s94] ss:$2 sm:$0xff] %v84
    %v96 = vld.sshfl [vmem:[#allocation1 + $0x10] sm:$0xff pattern:$0x75316420]
    %v97 = vld.sshfl [vmem:[#allocation1 + $0x18] sm:$0xff pattern:$0x75316420]
    %v102 = vsel %vm87, %v92, 0.0
    %v103 = vsel %vm88, %v93, 0.0
    %v104 = vsel %vm87, %v96, 0.0
    %v105 = vsel %vm88, %v97, 0.0
    %vm106 = vcmask 1043456
    %v107 = vsel %vm106, %v102, -inf
    %v108 = vrot.slane %v107, 4
    %v109 = vmax.f32 %v107, %v108
    %v110 = vrot.slane %v109, 2
    %v111 = vmax.f32 %v109, %v110
    %v112 = vrot.slane %v111, 1
    %v113 = vmax.f32 %v111, %v112
    %v114 = vsel %vm106, %v103, -inf
    %v115 = vrot.slane %v114, 4
    %v116 = vmax.f32 %v114, %v115
    %v117 = vrot.slane %v116, 2
    %v118 = vmax.f32 %v116, %v117
    %v119 = vrot.slane %v118, 1
    %v120 = vmax.f32 %v118, %v119
    %v121 = vsel %vm106, %v104, -inf
    %v122 = vrot.slane %v121, 4
    %v123 = vmax.f32 %v121, %v122
    %v124 = vrot.slane %v123, 2
    %v125 = vmax.f32 %v123, %v124
    %v126 = vrot.slane %v125, 1
    %v127 = vmax.f32 %v125, %v126
    %v128 = vsel %vm106, %v105, -inf
    %v129 = vrot.slane %v128, 4
    %v130 = vmax.f32 %v128, %v129
    %v131 = vrot.slane %v130, 2
    %v132 = vmax.f32 %v130, %v131
    %v133 = vrot.slane %v132, 1
    %v134 = vmax.f32 %v132, %v133
    %v135 = vsub.f32 %v102, %v113
    %v136 = vsub.f32 %v103, %v120
    %v137 = vsub.f32 %v104, %v127
    %v138 = vsub.f32 %v105, %v134
    %v139 = vmul.f32 %v135, 1.442695
    %v140 = vpow.pop %v139
    %v141 = vmul.f32 %v136, 1.442695
    %v142 = vpow.pop %v141
    %v143 = vmul.f32 %v137, 1.442695
    %v144 = vpow.pop %v143
    %v145 = vmul.f32 %v138, 1.442695
    %v146 = vpow.pop %v145
    %v147 = vsel %vm106, %v140, 0.0
    %v148 = vrot.slane %v147, 4
    %v149 = vadd.f32 %v147, %v148
    %v150 = vrot.slane %v149, 2
    %v151 = vadd.f32 %v149, %v150
    %v152 = vrot.slane %v151, 1
    %v153 = vadd.f32 %v151, %v152
    %v154 = vsel %vm106, %v142, 0.0
    %v155 = vrot.slane %v154, 4
    %v156 = vadd.f32 %v154, %v155
    %v157 = vrot.slane %v156, 2
    %v158 = vadd.f32 %v156, %v157
    %v159 = vrot.slane %v158, 1
    %v160 = vadd.f32 %v158, %v159
    %v161 = vsel %vm106, %v144, 0.0
    %v162 = vrot.slane %v161, 4
    %v163 = vadd.f32 %v161, %v162
    %v164 = vrot.slane %v163, 2
    %v165 = vadd.f32 %v163, %v164
    %v166 = vrot.slane %v165, 1
    %v167 = vadd.f32 %v165, %v166
    %v168 = vsel %vm106, %v146, 0.0
    %v169 = vrot.slane %v168, 4
    %v170 = vadd.f32 %v168, %v169
    %v171 = vrot.slane %v170, 2
    %v172 = vadd.f32 %v170, %v171
    %v173 = vrot.slane %v172, 1
    %v174 = vadd.f32 %v172, %v173
    %v175 = vrcp.pop %v153
    %v176 = vrcp.pop %v160
    %v177 = vrcp.pop %v167
    %v178 = vrcp.pop %v174
    %v179 = vmul.f32 %v140, %v175
    %v180 = vmul.f32 %v142, %v176
    %v181 = vmul.f32 %v144, %v177
    %v182 = vmul.f32 %v146, %v178
    %v183 = vlaneseq
    %v184 = vshrl.u32 %v183, 7
    %v185 = vld [vmem:[#allocation5] sm:$0x3]
    %v186 = vld [vmem:[#allocation5 + $0x2] sm:$0x3]
    %v187 = vperm.slane %v185, 0
    %v188 = vperm.slane %v185, 1
    %v189 = vperm.slane %v186, 0
    %v190 = vperm.slane %v186, 1
    %vm191 = vcmp.eq.s32.totalorder %v187, %v184
    %vm192 = vcmp.eq.s32.totalorder %v188, %v184
    %vm193 = vcmp.eq.s32.totalorder %v189, %v184
    %vm194 = vcmp.eq.s32.totalorder %v190, %v184
    %vm195 = vmand %vm191, %vm87
    %vm196 = vmand %vm192, %vm88
    %vm197 = vmand %vm193, %vm87
    %vm198 = vmand %vm194, %vm88
    %v199 = vsel %vm195, %v179, 0.0
    %v200 = vsel %vm196, %v180, 0.0
    %v201 = vsel %vm197, %v181, 0.0
    %v202 = vsel %vm198, %v182, 0.0
    %v203 = vsel %vm87, %v179, 0.0
    %v204 = vsel %vm88, %v180, 0.0
    %v205 = vsel %vm87, %v181, 0.0
    %v206 = vsel %vm88, %v182, 0.0
    %v207 = vsel %vm195, 1.0, 0.0
    %v208 = vsel %vm196, 1.0, 0.0
    %v209 = vsel %vm197, 1.0, 0.0
    %v210 = vsel %vm198, 1.0, 0.0
    %v211 = vadd.f32 %v203, %v207
    %v212 = vadd.f32 %v204, %v208
    %v213 = vadd.f32 %v205, %v209
    %v214 = vadd.f32 %v206, %v210
    %v215 = vld [vmem:[#allocation7] sm:$0x3]
    %v216 = vsel %vm106, %v199, 0.0
    %v217 = vsel %vm106, %v200, 0.0
    %v218 = vadd.f32 %v216, %v217
    %219 = vadd.xlane.f32.xlu0 %v218
    %v220 = vpop.xlane.xlu0 %219
    %v221 = vsel %vm106, %v201, 0.0
    %v222 = vsel %vm106, %v202, 0.0
    %v223 = vadd.f32 %v221, %v222
    %224 = vadd.xlane.f32.xlu0 %v223
    %v225 = vpop.xlane.xlu0 %224
    %v228 = vperm.slane %v220, %v76
    %v229 = vperm.slane %v225, %v76
    %vm230 = vcmask 1041409
    %v231 = vsel %vm230, %v229, %v228
    %v233 = vadd.f32 %v215, %v231
    %vm234 = vcmask 25600
    %235 = vst.msk [vmem:[#allocation7] sm:$0x3] %vm234, %v233
    %v236 = vld [vmem:[#allocation8] sm:$0x3]
    %v237 = vsel %vm106, %v211, 0.0
    %v238 = vsel %vm106, %v212, 0.0
    %v239 = vadd.f32 %v237, %v238
    %240 = vadd.xlane.f32.xlu0 %v239
    %v241 = vpop.xlane.xlu0 %240
    %v242 = vsel %vm106, %v213, 0.0
    %v243 = vsel %vm106, %v214, 0.0
    %v244 = vadd.f32 %v242, %v243
    %245 = vadd.xlane.f32.xlu0 %v244
    %v246 = vpop.xlane.xlu0 %245
    %v249 = vperm.slane %v241, %v76
    %v250 = vperm.slane %v246, %v76
    %v251 = vsel %vm230, %v250, %v249
    %v253 = vadd.f32 %v236, %v251
    %254 = vst.msk [vmem:[#allocation8] sm:$0x3] %vm234, %v253
    // Predicated region
    $region22: #{tpu_custom_call.1} parent=1 // pred_check
      _
    $region23: #{tpu_custom_call.1} parent=1 // pred_check_branch
      %256 = sbr.rel (0) target = $region25
    $region24: #{tpu_custom_call.1} parent=1 // pred_region
      %258 = vsyncadd [#allocation4], 0
      %s260 = sshll.u32 [#allocation7], 4
      %s261 = int_to_ptr.vmem [resolvable:$true] %s260
      %s262 = sshll.u32 %s2, 4
      %s263 = int_to_ptr.hbm [resolvable:$true] %s262
      %265 = dma.vmem_to_hbm [thread:$0]  %s261, 32, %s263, [#allocation4]
    $region25: #{tpu_custom_call.1} parent=1 // pred_fallthru
      _
    // Predicated region
    $region26: #{tpu_custom_call.1} parent=1 // pred_check
      _
    $region27: #{tpu_custom_call.1} parent=1 // pred_check_branch
      %267 = sbr.rel (0) target = $region29
    $region28: #{tpu_custom_call.1} parent=1 // pred_region
      %269 = vsyncadd [#allocation9], 0
      %s271 = sshll.u32 [#allocation8], 4
      %s272 = int_to_ptr.vmem [resolvable:$true] %s271
      %s273 = sshll.u32 %s3, 4
      %s274 = int_to_ptr.hbm [resolvable:$true] %s273
      %276 = dma.vmem_to_hbm [thread:$0]  %s272, 32, %s274, [#allocation9]
    $region29: #{tpu_custom_call.1} parent=1 // pred_fallthru
      _
    // Predicated region
    $region30: #{tpu_custom_call.1} parent=1 // pred_check
      _
    $region31: #{tpu_custom_call.1} parent=1 // pred_check_branch
      %278 = sbr.rel (0) target = $region33
    $region32: #{tpu_custom_call.1} parent=1 // pred_region
      %280 = dma.done [#allocation4], 32
    $region33: #{tpu_custom_call.1} parent=1 // pred_fallthru
      _
    // Predicated region
    $region34: #{tpu_custom_call.1} parent=1 // pred_check
      _
    $region35: #{tpu_custom_call.1} parent=1 // pred_check_branch
      %282 = sbr.rel (0) target = $region37
    $region36: #{tpu_custom_call.1} parent=1 // pred_region
      %284 = dma.done [#allocation9], 32
    $region37: #{tpu_custom_call.1} parent=1 // pred_fallthru
      _
    %285 = vsyncpa [#allocation3], 1
    %286 = vsyncpa [#allocation6], 1
    %287 = vsyncpa [#allocation4], 1
    %288 = vsyncpa [#allocation9], 1

</llo_original>
